<compile_context>
chip_gen: v7x
topology: tpu7x:2x2x1
jax: 0.10.0
libtpu: 0.0.40
codegen_flags: <defaults>
</compile_context>

<pallas_src>
import functools

import jax
import jax.numpy as jnp
from jax import lax
from jax.experimental import pallas as pl
from jax.experimental.pallas import tpu as pltpu

_LANES = 128
_TARGET_BLOCK_BYTES = 2 * 1024 * 1024  # ~2 MiB blocks: ~85% of HBM roofline, v5e-safe

# Hash constants (murmur3 fmix32 / golden ratio), as 32-bit literals.
_GOLDEN = -1640531527        # 0x9E3779B9 as signed int32
_M1 = 0x85EBCA6B
_M2 = 0xC2B2AE35
_ONE_F32_BITS = 0x3F800000


def _round_up(a, m):
    return ((a + m - 1) // m) * m


def _random_ny_kernel(seed_ref, x_ref, o_ref, *, rate):
    """Mix one (tile_rows, 128) tile with on-chip uniform noise.

    seed_ref: SMEM int32[1] scalar-prefetch -> PRNG seed
    x_ref   : VMEM (tile_rows, 128) input tile
    o_ref   : VMEM (tile_rows, 128) output tile
    """
    tile_rows = x_ref.shape[0]

    # Grid-invariant counter = global flattened element index.
    row = lax.broadcasted_iota(jnp.int32, x_ref.shape, 0)
    lane = lax.broadcasted_iota(jnp.int32, x_ref.shape, 1)
    g_row = pl.program_id(0) * tile_rows + row
    idx = g_row * _LANES + lane

    # Counter-based hash (murmur3 fmix32).  Only plain integer VPU ops, so it
    # lowers both through Mosaic and the interpret fallback.
    z = lax.bitcast_convert_type(idx * jnp.int32(_GOLDEN) + seed_ref[0], jnp.uint32)
    z = z ^ (z >> 16)
    z = z * jnp.uint32(_M1)
    z = z ^ (z >> 13)
    z = z * jnp.uint32(_M2)
    z = z ^ (z >> 16)

    # Mantissa trick: 23 random bits | exponent(1.0) -> [1,2), minus 1 -> U[0,1).
    mant = (z >> 9) | jnp.uint32(_ONE_F32_BITS)
    ny = lax.bitcast_convert_type(mant, jnp.float32) - 1.0

    x = x_ref[...].astype(jnp.float32)
    o_ref[...] = (x * jnp.float32(1.0 - rate) + ny * jnp.float32(rate)).astype(o_ref.dtype)


def _apply_noise(x, seed, *, rate, donate=False):
    """Run the noise-mixing kernel over the whole tensor (apply branch)."""
    orig_shape = x.shape
    n = x.size
    itemsize = jnp.dtype(x.dtype).itemsize
    sub_mult = max(8, 32 // itemsize)  # sublane multiple: 8 f32, 16 bf16, 32 int8

    # Fast path (common case): pure reshape, no pad / slice copies on the hot path.
    padded = (n % (_LANES * sub_mult)) != 0
    if not padded:
        rows = n // _LANES
        x2 = x.reshape(rows, _LANES)
    else:
        rows = _round_up(pl.cdiv(n, _LANES), sub_mult)
        x2 = jnp.pad(jnp.ravel(x), (0, rows * _LANES - n)).reshape(rows, _LANES)

    # ~2 MiB blocks (dtype-scaled), but always >= 2 tiles when splittable so both
    # v7x TensorCores stream (grid axis is "parallel").
    target_rows = _TARGET_BLOCK_BYTES // (_LANES * itemsize)
    half_rows = max(sub_mult, _round_up(pl.cdiv(rows, 2), sub_mult))
    tile_rows = min(target_rows, half_rows)
    num_tiles = pl.cdiv(rows, tile_rows)

    seed_arr = jnp.reshape(seed, (1,)).astype(jnp.int32)

    out2 = pl.pallas_call(
        functools.partial(_random_ny_kernel, rate=float(rate)),
        out_shape=jax.ShapeDtypeStruct((rows, _LANES), x.dtype),
        grid_spec=pltpu.PrefetchScalarGridSpec(
            num_scalar_prefetch=1,
            grid=(num_tiles,),
            in_specs=[pl.BlockSpec((tile_rows, _LANES), lambda i, _s: (i, 0))],
            out_specs=pl.BlockSpec((tile_rows, _LANES), lambda i, _s: (i, 0)),
        ),
        compiler_params=pltpu.CompilerParams(dimension_semantics=("parallel",)),
        # Operand 0 is the scalar-prefetch seed, operand 1 is x2.  Only alias when
        # the caller donates x (otherwise XLA would insert a defensive copy).
        input_output_aliases=({1: 0} if donate else {}),
    )(seed_arr, x2)

    if padded:
        return out2.reshape(-1)[:n].reshape(orig_shape)
    return out2.reshape(orig_shape)


def random_ny(x, key, *, prob=0.5, rate=0.2, donate=False):
    """Pallas implementation of Random_Ny.forward."""
    # TODO(synk): the module also stores `self.last_applied` (the noise tensor / zeros)
    # as a stateful attribute; only the forward output is produced here.
    if prob <= 0.0:
        return x

    k_gate, k_seed = jax.random.split(key)
    seed = jax.random.randint(k_seed, (), 0, jnp.iinfo(jnp.int32).max, dtype=jnp.int32)

    if prob >= 1.0:
        return _apply_noise(x, seed, rate=rate, donate=donate)

    apply_flag = jax.random.uniform(k_gate, ()) < prob
    # Traced Bernoulli gate: skip the kernel (and its full HBM pass) entirely on the
    # identity branch.
    return lax.cond(
        apply_flag,
        lambda xx: _apply_noise(xx, seed, rate=rate, donate=donate),
        lambda xx: xx,
        x,
    )


if __name__ == "__main__":
    key = jax.random.PRNGKey(0)
    kx, k1, k2, k3 = jax.random.split(key, 4)

    B, C, H, W = 2, 4, 16, 16
    x = jax.random.normal(kx, (B, C, H, W), dtype=jnp.float32)
    rate = 0.2

    # Forced-apply branch (prob=1.0): out = x*(1-rate) + ny*rate with ny ~ U[0,1).
    out_apply = jax.block_until_ready(random_ny(x, k1, prob=1.0, rate=rate))
    assert out_apply.shape == x.shape and out_apply.dtype == x.dtype
    ny_rec = (out_apply - x * (1.0 - rate)) / rate
    assert bool(jnp.all(ny_rec >= -1e-3)), "recovered noise below 0"
    assert bool(jnp.all(ny_rec < 1.0 + 1e-3)), "recovered noise above 1"
    assert float(jnp.std(ny_rec)) > 0.05, "noise looks degenerate/constant"

    # Never-apply branch (prob=0.0): exact identity.
    out_id = jax.block_until_ready(random_ny(x, k2, prob=0.0, rate=rate))
    assert bool(jnp.array_equal(out_id, x)), "identity branch modified x"

    # Traced-gate path (lax.cond around the kernel) also runs cleanly.
    out_half = jax.block_until_ready(random_ny(x, k3, prob=0.5, rate=rate))
    assert out_half.shape == x.shape and out_half.dtype == x.dtype

    print("KERNEL_OK")
</pallas_src>

<mosaic_0001>
module attributes {stable_mosaic.version = 11 : i64} {
  func.func @_random_ny_kernel(%arg0: i32, %arg1: memref<1xi32, #tpu.memory_space<smem>>, %arg2: memref<8x128xf32, #tpu.memory_space<vmem>>, %arg3: memref<8x128xf32, #tpu.memory_space<vmem>>) attributes {dimension_semantics = [#tpu.dimension_semantics<parallel>], iteration_bounds = array<i64: 2>, scalar_prefetch = 1 : i64, scratch_operands = 0 : i64, tpu.core_type = #tpu.core_type<tc>, window_params = [{transform_indices = @transform_0, window_bounds = array<i64: 8, 128>}, {transform_indices = @transform_1, window_bounds = array<i64: 8, 128>}]} {
    %0 = tpu.iota {dimensions = array<i32: 0>} : vector<8x128xi32>
    %1 = tpu.iota {dimensions = array<i32: 1>} : vector<8x128xi32>
    %c8_i32 = arith.constant 8 : i32
    %2 = arith.muli %arg0, %c8_i32 : i32
    %3 = vector.broadcast %2 : i32 to vector<8x128xi32>
    %4 = arith.addi %3, %0 : vector<8x128xi32>
    %c128_i32 = arith.constant 128 : i32
    %5 = vector.broadcast %c128_i32 : i32 to vector<8x128xi32>
    %6 = arith.muli %4, %5 : vector<8x128xi32>
    %7 = arith.addi %6, %1 : vector<8x128xi32>
    %c-1640531527_i32 = arith.constant -1640531527 : i32
    %8 = vector.broadcast %c-1640531527_i32 : i32 to vector<8x128xi32>
    %9 = arith.muli %7, %8 : vector<8x128xi32>
    %c0 = arith.constant 0 : index
    %10 = memref.load %arg1[%c0] : memref<1xi32, #tpu.memory_space<smem>>
    %11 = vector.broadcast %10 : i32 to vector<8x128xi32>
    %12 = arith.addi %9, %11 : vector<8x128xi32>
    %13 = tpu.bitcast %12 : vector<8x128xi32> -> vector<8x128xi32>
    %c16_i32 = arith.constant 16 : i32
    %14 = vector.broadcast %c16_i32 : i32 to vector<8x128xi32>
    %15 = arith.shrui %13, %14 : vector<8x128xi32>
    %16 = arith.xori %13, %15 : vector<8x128xi32>
    %c-2048144789_i32 = arith.constant -2048144789 : i32
    %17 = vector.broadcast %c-2048144789_i32 : i32 to vector<8x128xi32>
    %18 = arith.muli %16, %17 : vector<8x128xi32>
    %c13_i32 = arith.constant 13 : i32
    %19 = vector.broadcast %c13_i32 : i32 to vector<8x128xi32>
    %20 = arith.shrui %18, %19 : vector<8x128xi32>
    %21 = arith.xori %18, %20 : vector<8x128xi32>
    %c-1028477387_i32 = arith.constant -1028477387 : i32
    %22 = vector.broadcast %c-1028477387_i32 : i32 to vector<8x128xi32>
    %23 = arith.muli %21, %22 : vector<8x128xi32>
    %c16_i32_0 = arith.constant 16 : i32
    %24 = vector.broadcast %c16_i32_0 : i32 to vector<8x128xi32>
    %25 = arith.shrui %23, %24 : vector<8x128xi32>
    %26 = arith.xori %23, %25 : vector<8x128xi32>
    %c9_i32 = arith.constant 9 : i32
    %27 = vector.broadcast %c9_i32 : i32 to vector<8x128xi32>
    %28 = arith.shrui %26, %27 : vector<8x128xi32>
    %c1065353216_i32 = arith.constant 1065353216 : i32
    %29 = vector.broadcast %c1065353216_i32 : i32 to vector<8x128xi32>
    %30 = arith.ori %28, %29 : vector<8x128xi32>
    %31 = tpu.bitcast %30 : vector<8x128xi32> -> vector<8x128xf32>
    %cst = arith.constant 1.000000e+00 : f32
    %32 = vector.broadcast %cst : f32 to vector<8x128xf32>
    %33 = arith.subf %31, %32 : vector<8x128xf32>
    %c0_1 = arith.constant 0 : index
    %c0_2 = arith.constant 0 : index
    %34 = vector.load %arg2[%c0_1, %c0_2] : memref<8x128xf32, #tpu.memory_space<vmem>>, vector<8x128xf32>
    %cst_3 = arith.constant 8.000000e-01 : f32
    %35 = vector.broadcast %cst_3 : f32 to vector<8x128xf32>
    %36 = arith.mulf %34, %35 : vector<8x128xf32>
    %cst_4 = arith.constant 2.000000e-01 : f32
    %37 = vector.broadcast %cst_4 : f32 to vector<8x128xf32>
    %38 = arith.mulf %33, %37 : vector<8x128xf32>
    %39 = arith.addf %36, %38 : vector<8x128xf32>
    %c0_5 = arith.constant 0 : index
    %c0_6 = arith.constant 0 : index
    %40 = vector.load %arg3[%c0_5, %c0_6] : memref<8x128xf32, #tpu.memory_space<vmem>>, vector<8x128xf32>
    tpu.vector_store %arg3[%c0_5, %c0_6], %39 {strides = array<i32>} : memref<8x128xf32, #tpu.memory_space<vmem>>, vector<8x128xf32>,
    return
  }
  func.func @transform_0(%arg0: i32, %arg1: memref<1xi32, #tpu.memory_space<smem>>) -> (i32, i32) {
    %c0_i32 = arith.constant 0 : i32
    %c0_i32_0 = arith.constant 0 : i32
    return %arg0, %c0_i32 : i32, i32
  }
  func.func @transform_1(%arg0: i32, %arg1: memref<1xi32, #tpu.memory_space<smem>>) -> (i32, i32) {
    %c0_i32 = arith.constant 0 : i32
    %c0_i32_0 = arith.constant 0 : i32
    return %arg0, %c0_i32 : i32, i32
  }
}

</mosaic_0001>

<llo_original>
// kernel: tpu_custom_call.1
$region0: #{tpu_custom_call.1}
  #allocation0 [shape = 'u32[]', space=smem, size = 0x4, offset = 0x4, fixed_abs, tag = 'smem constant byte address 0x4 - core index']
  #allocation1 [shape = 'u32[144,128]{1,0:T(1,128)}', space=vmem, size = 0x12000, scoped, tag = 'internal scratch']
  #allocation2 [shape = 's32[1]{0}', space=sflag, size = 0x4, scoped, tag = 'scoped memory for tpu_custom_call.1']
  #allocation3 [shape = 's32[1]{0:T(128)S(6)}', space=smem, size = 0x200, scoped, tag = 'prefetched SMEM operand 0']
  %s0 = inlined_call_operand.<no memory space> [shape: s32[1], index: 0, kind: input, shape index: {}]
  %s1 = inlined_call_operand.hbm [shape: f32[16,128], index: 1, kind: input, shape index: {}]
  %s2 = inlined_call_operand.hbm [shape: f32[16,128], index: 2, kind: output, shape index: {}]
  %s3 = sld [smem:[#allocation0]]
  $region41: #{tpu_custom_call.1} parent=0
    _
  %s5 = ssub.s32 1, %s3
  %s6 = scalar_select 0, %s5, %s3
  %7 = sst [smem:[#allocation3]] %s0
  $region1: #{tpu_custom_call.1} parent=0
    #allocation4 [shape = 'u8[8192]{0}', space=vmem, size = 0x2000, scoped, tag = 'input window, operand 1']
    #allocation5 [shape = 's32[2]{0}', space=sflag, size = 0x8, scoped, tag = 'scoped memory for tpu_custom_call.1']
    #allocation6 [shape = 's32[2]{0}', space=sflag, size = 0x8, scoped, tag = 'scoped memory for tpu_custom_call.1']
    #allocation7 [shape = 'u8[8192]{0}', space=vmem, size = 0x2000, scoped, tag = 'output window, operand 0']
    %8 = vsyncpa [#allocation5], 0
    %s9 = scalar_lea.sflag [#allocation5], 1
    %10 = vsyncpa %s9, 0
    %11 = vsyncpa [#allocation6], 0
    %s12 = scalar_lea.sflag [#allocation6], 1
    %13 = vsyncpa %s12, 0
    loop: start=0, step=1, limit=4
    $region2: #{tpu_custom_call.1} parent=1 // loop_pre_header
      _
    $region3: #{tpu_custom_call.1} parent=1 // loop_header
      %s15 = sphi 0, %s19
      %p16 = scmp.ge.s32.totalorder %s15, 4
      %s25 = sphi 0, %s27
      %s28 = sphi 0, %s25
      %s29 = sphi 0, %s28
      %s45 = sphi 0, %s29
      %s51 = sphi 0, %s53
      %s54 = sphi 0, %s51
      %s55 = sphi 0, %s54
      %s71 = sphi 0, %s55
    $region4: #{tpu_custom_call.1} parent=1 // loop_header_branch
      %18 = sbr.rel (%p16) target = $region8
    $region5: #{tpu_custom_call.1} parent=1 // loop_body
      %s20 = ssub.s32 %s15, 1
      %s21 = ssub.s32 %s15, 2
      %s22 = sadd.s32 %s15, 1
      %s23 = ssub.s32 %s15, %s22
      %p24 = scmp.eq.s32.totalorder %s23, 0
      %s26 = sadd.s32 %s25, 1
      %s27 = scalar_select %p24, %s25, %s26
      %p30 = pneg %p24
      %p31 = scmp.eq.s32.totalorder %s15, 1
      %p32 = por %p30, %p31
      %p33 = scmp.ne.s32.totalorder %s25, %s28
      %p34 = scmp.eq.s32.totalorder %s15, 0
      %p35 = por %p33, %p34
      %p36 = scmp.ne.s32.totalorder %s25, %s28
      %p37 = scmp.eq.s32.totalorder %s20, 1
      %p38 = por %p36, %p37
      %p39 = scmp.ne.s32.totalorder %s28, %s29
      %p40 = scmp.eq.s32.totalorder %s20, 0
      %p41 = por %p39, %p40
      %p42 = scmp.ne.s32.totalorder %s28, %s29
      %p43 = scmp.eq.s32.totalorder %s21, 1
      %p44 = por %p42, %p43
      %p46 = scmp.ne.s32.totalorder %s29, %s45
      %p47 = scmp.eq.s32.totalorder %s21, 0
      %p48 = por %p46, %p47
      %s49 = ssub.s32 %s15, %s22
      %p50 = scmp.eq.s32.totalorder %s49, 0
      %s52 = sadd.s32 %s51, 1
      %s53 = scalar_select %p50, %s51, %s52
      %p56 = pneg %p50
      %p57 = scmp.eq.s32.totalorder %s15, 1
      %p58 = por %p56, %p57
      %p59 = scmp.ne.s32.totalorder %s51, %s54
      %p60 = scmp.eq.s32.totalorder %s15, 0
      %p61 = por %p59, %p60
      %p62 = scmp.ne.s32.totalorder %s51, %s54
      %p63 = scmp.eq.s32.totalorder %s20, 1
      %p64 = por %p62, %p63
      %p65 = scmp.ne.s32.totalorder %s54, %s55
      %p66 = scmp.eq.s32.totalorder %s20, 0
      %p67 = por %p65, %p66
      %p68 = scmp.ne.s32.totalorder %s54, %s55
      %p69 = scmp.eq.s32.totalorder %s21, 1
      %p70 = por %p68, %p69
      %p72 = scmp.ne.s32.totalorder %s55, %s71
      %p73 = scmp.eq.s32.totalorder %s21, 0
      %p74 = por %p72, %p73
      %p75 = scmp.le.s32.totalorder 1, %s15
      %p76 = scmp.lt.s32.totalorder %s15, 3
      %p77 = pnand %p75, %p76
      %p78 = pneg %p77
      // Predicated region
      $region9: #{tpu_custom_call.1} parent=5 // pred_check
        _
      $region10: #{tpu_custom_call.1} parent=5 // pred_check_branch
        %80 = sbr.rel (%p77) target = $region12
      $region11: #{tpu_custom_call.1} parent=5 // pred_region
        %s81 = ssub.s32 %s15, 1
      $region12: #{tpu_custom_call.1} parent=5 // pred_fallthru
        _
      %p82 = scmp.lt.s32.totalorder %s15, 2
      // Predicated region
      $region13: #{tpu_custom_call.1} parent=5 // pred_check
        %p83 = pneg %p82
      $region14: #{tpu_custom_call.1} parent=5 // pred_check_branch
        %85 = sbr.rel (%p83) target = $region16
      $region15: #{tpu_custom_call.1} parent=5 // pred_region
        // Predicated region
        $region17: #{tpu_custom_call.1} parent=15 // pred_check
          %p86 = pneg %p35
        $region18: #{tpu_custom_call.1} parent=15 // pred_check_branch
          %88 = sbr.rel (%p86) target = $region20
        $region19: #{tpu_custom_call.1} parent=15 // pred_region
          %s89 = sand.u32 %s25, 1
          %s90 = scalar_lea.sflag [#allocation5], %s89
          %s91 = sand.u32 %s25, 1
          %s92 = smul.addr %s91, 8
          %s93 = scalar_lea.vmem [#allocation4], %s92
          %s95 = ssub.s32 128, 128
          %96 = vsyncadd %s90, %s95
          %s97 = smul.addr %s15, 128
          %s98 = scalar_lea.hbm %s1, %s97
          %s100 = sshll.u32 %s93, 4
          %s101 = int_to_ptr.vmem [resolvable:$true] %s100
          %103 = dma.hbm_to_vmem [thread:$0]  %s98, 128, %s101, %s90
        $region20: #{tpu_custom_call.1} parent=15 // pred_fallthru
          _
      $region16: #{tpu_custom_call.1} parent=5 // pred_fallthru
        _
      %p104 = scmp.le.s32.totalorder 1, %s15
      %p105 = scmp.lt.s32.totalorder %s15, 3
      %p106 = pnand %p104, %p105
      %p107 = pneg %p106
      // Predicated region
      $region21: #{tpu_custom_call.1} parent=5 // pred_check
        _
      $region22: #{tpu_custom_call.1} parent=5 // pred_check_branch
        %109 = sbr.rel (%p106) target = $region24
      $region23: #{tpu_custom_call.1} parent=5 // pred_region
        %s110 = ssub.s32 %s15, 1
        %s111 = sand.u32 %s28, 1
        %s112 = scalar_lea.sflag [#allocation5], %s111
        %s113 = sand.u32 %s28, 1
        %s114 = smul.addr %s113, 8
        %s115 = scalar_lea.vmem [#allocation4], %s114
        // Predicated region
        $region25: #{tpu_custom_call.1} parent=23 // pred_check
          %p116 = pneg %p41
        $region26: #{tpu_custom_call.1} parent=23 // pred_check_branch
          %118 = sbr.rel (%p116) target = $region28
        $region27: #{tpu_custom_call.1} parent=23 // pred_region
          %119 = dma.done %s112, 128
        $region28: #{tpu_custom_call.1} parent=23 // pred_fallthru
          _
        %s120 = sand.u32 %s28, 1
        %s121 = scalar_lea.sflag [#allocation5], %s120
        %s122 = sand.u32 %s28, 1
        %s123 = smul.addr %s122, 8
        %s124 = scalar_lea.vmem [#allocation4], %s123
        %p125 = pneg %p41
        %p126 = pneg %p38
        %p127 = pneg %p67
        %p128 = pneg %p64
        %s129 = sand.u32 %s54, 1
        %s130 = scalar_lea.sflag [#allocation6], %s129
        %s131 = sand.u32 %s54, 1
        %s132 = smul.addr %s131, 8
        %s133 = scalar_lea.vmem [#allocation7], %s132
        %v134 = vlaneseq
        %v135 = vshrl.u32 %v134, 7
        %v136 = vlaneseq
        %v137 = vand.u32 %v136, 127
        %s138 = smul.u32 %s20, 8
        %v139 = vstv %s138
        %v140 = vadd.s32 %v139, %v135
        %v141 = vmul.u32 %v140, 128
        %v142 = vadd.s32 %v141, %v137
        %v143 = vmul.u32 %v142, 2654435769
        %s144 = sld [smem:[#allocation3]]
        %v145 = vstv %s144
        %v146 = vadd.s32 %v143, %v145
        %v147 = vshrl.u32 %v146, 16
        %v148 = vxor.u32 %v146, %v147
        %v149 = vmul.u32 %v148, 2246822507
        %v150 = vshrl.u32 %v149, 13
        %v151 = vxor.u32 %v149, %v150
        %v152 = vmul.u32 %v151, 3266489909
        %v153 = vshrl.u32 %v152, 16
        %v154 = vxor.u32 %v152, %v153
        %v155 = vshrl.u32 %v154, 9
        %v156 = vor.u32 %v155, 1065353216
        %v158 = vsub.f32 %v156, 1.0
        %v159 = vld [vmem:[%s115] sm:$0xff]
        %v160 = vmul.f32 %v159, 0.8
        %v161 = vmul.f32 %v158, 0.2
        %v162 = vadd.f32 %v160, %v161
        %163 = vst [vmem:[%s133] sm:$0xff] %v162
        %s164 = sand.u32 %s54, 1
        %s165 = scalar_lea.sflag [#allocation6], %s164
        %s166 = sand.u32 %s54, 1
        %s167 = smul.addr %s166, 8
        %s168 = scalar_lea.vmem [#allocation7], %s167
        // Predicated region
        $region29: #{tpu_custom_call.1} parent=23 // pred_check
          %p169 = pneg %p64
        $region30: #{tpu_custom_call.1} parent=23 // pred_check_branch
          %171 = sbr.rel (%p169) target = $region32
        $region31: #{tpu_custom_call.1} parent=23 // pred_region
          %s173 = ssub.s32 128, 128
          %174 = vsyncadd %s165, %s173
          %s175 = smul.addr %s20, 128
          %s176 = scalar_lea.hbm %s2, %s175
          %s178 = sshll.u32 %s168, 4
          %s179 = int_to_ptr.vmem [resolvable:$true] %s178
          %181 = dma.vmem_to_hbm [thread:$0]  %s179, 128, %s176, %s165
        $region32: #{tpu_custom_call.1} parent=23 // pred_fallthru
          _
      $region24: #{tpu_custom_call.1} parent=5 // pred_fallthru
        _
      %p182 = scmp.le.s32.totalorder 2, %s15
      // Predicated region
      $region33: #{tpu_custom_call.1} parent=5 // pred_check
        %p183 = pneg %p182
      $region34: #{tpu_custom_call.1} parent=5 // pred_check_branch
        %185 = sbr.rel (%p183) target = $region36
      $region35: #{tpu_custom_call.1} parent=5 // pred_region
        %s186 = ssub.s32 %s15, 2
        // Predicated region
        $region37: #{tpu_custom_call.1} parent=35 // pred_check
          %p187 = pneg %p70
        $region38: #{tpu_custom_call.1} parent=35 // pred_check_branch
          %189 = sbr.rel (%p187) target = $region40
        $region39: #{tpu_custom_call.1} parent=35 // pred_region
          %s190 = sand.u32 %s55, 1
          %s191 = scalar_lea.sflag [#allocation6], %s190
          %s192 = sand.u32 %s55, 1
          %s193 = smul.addr %s192, 8
          %s194 = scalar_lea.vmem [#allocation7], %s193
          %195 = dma.done %s191, 128
        $region40: #{tpu_custom_call.1} parent=35 // pred_fallthru
          _
      $region36: #{tpu_custom_call.1} parent=5 // pred_fallthru
        _
    $region6: #{tpu_custom_call.1} parent=1 // loop_footer
      %s19 = sadd.s32 1, %s15
    $region7: #{tpu_custom_call.1} parent=1 // loop_footer_branch
      %14 = sbr.rel target = $region3
    $region8: #{tpu_custom_call.1} parent=1 // loop_exit
      _
    %196 = vsyncpa [#allocation5], 1
    %s197 = scalar_lea.sflag [#allocation5], 1
    %198 = vsyncpa %s197, 1
    %199 = vsyncpa [#allocation6], 1
    %s200 = scalar_lea.sflag [#allocation6], 1
    %201 = vsyncpa %s200, 1

</llo_original>
